<compile_context>
chip_gen: v7x
topology: tpu7x:2x2x1
jax: 0.10.0
libtpu: 0.0.40
codegen_flags: <defaults>
</compile_context>

<pallas_src>
import jax
import jax.numpy as jnp
from jax.experimental import pallas as pl
from jax.experimental.pallas import tpu as pltpu


def _round_up(x: int, m: int) -> int:
    return ((x + m - 1) // m) * m


def backbone_proj_kernel(x_ref, w_ref, b_ref, o_ref, acc_ref):
    """Tiled linear projection: o = x @ w + b.

    Grid = (M/tm, N/tn, K/tk) with K innermost (reduction axis).
    f32 accumulation in VMEM scratch; bias added once in the finalize branch
    (keeps the VPU add off the MXU-bound inner loop).
    """
    k = pl.program_id(2)

    @pl.when(k == 0)
    def _init():
        acc_ref[...] = jnp.zeros_like(acc_ref)

    acc_ref[...] += jnp.dot(
        x_ref[...], w_ref[...], preferred_element_type=jnp.float32
    )

    @pl.when(k == pl.num_programs(2) - 1)
    def _finalize():
        # b_ref is (1, tn) f32; broadcasts over the tm sublanes.
        o_ref[...] = (acc_ref[...] + b_ref[...]).astype(o_ref.dtype)


def base_backbone_forward(
    x,
    weight,
    bias,
    *,
    tm: int = 256,
    tn: int = 256,
    tk: int = 1024,
    compute_dtype=jnp.bfloat16,
):
    """
    x      : (n, t, c, h, w)
    weight : (c*h*w, d)
    bias   : (d,) or (1, d)
    returns: (n, t, d)  (same dtype as x)
    """
    n, t, c, h, w = x.shape
    feat = c * h * w
    d = weight.shape[1]
    M = n * t
    out_dtype = x.dtype

    x2 = x.reshape(M, feat)                 # glue reshape in plain JAX
    b2 = bias.reshape(1, d)

    # --- Tile sizing: clamp to the (padded) problem size. With bf16 inputs:
    # 2 inputs x 2 buffers x (tm*tk + tk*tn)*2B + f32 acc (tm*tn*4B)
    # = 2*2*(256*1024 + 1024*256)*2B + 256KiB ~= 4.25 MiB  << 48 MiB limit.
    tm = min(tm, _round_up(M, 8))
    tn = min(tn, _round_up(d, 128))
    tk = min(tk, _round_up(feat, 128))

    # --- Pad to tile multiples. Zero-padding K is numerically free; padding
    # N keeps output stores lane-dense (multiples of 128); pad is sliced off.
    Mp = _round_up(M, tm)
    Kp = _round_up(feat, tk)
    Np = _round_up(d, tn)

    x2p = jnp.pad(x2, ((0, Mp - M), (0, Kp - feat))).astype(compute_dtype)
    wp = jnp.pad(weight, ((0, Kp - feat), (0, Np - d))).astype(compute_dtype)
    bp = jnp.pad(b2, ((0, 0), (0, Np - d))).astype(jnp.float32)

    grid = (Mp // tm, Np // tn, Kp // tk)

    cost = pl.CostEstimate(
        flops=2 * M * feat * d,
        transcendentals=0,
        bytes_accessed=(
            x2p.size * x2p.dtype.itemsize
            + wp.size * wp.dtype.itemsize
            + bp.size * bp.dtype.itemsize
            + Mp * Np * jnp.dtype(out_dtype).itemsize
        ),
    )

    outp = pl.pallas_call(
        backbone_proj_kernel,
        out_shape=jax.ShapeDtypeStruct((Mp, Np), out_dtype),
        grid_spec=pltpu.PrefetchScalarGridSpec(
            num_scalar_prefetch=0,
            grid=grid,
            in_specs=[
                pl.BlockSpec((tm, tk), lambda i, j, k: (i, k)),   # x tile
                pl.BlockSpec((tk, tn), lambda i, j, k: (k, j)),   # w tile
                pl.BlockSpec((1, tn), lambda i, j, k: (0, j)),    # bias (resident)
            ],
            out_specs=pl.BlockSpec((tm, tn), lambda i, j, k: (i, j)),
            scratch_shapes=[pltpu.VMEM((tm, tn), jnp.float32)],
        ),
        compiler_params=pltpu.CompilerParams(
            dimension_semantics=("parallel", "parallel", "arbitrary"),
            vmem_limit_bytes=48 * 1024 * 1024,   # headroom even on 64 MiB v7x
        ),
        cost_estimate=cost,
    )(x2p, wp, bp)

    return outp[:M, :d].reshape(n, t, d)


if __name__ == "__main__":
    # Small shapes consistent with (n, t, c, h, w) -> (n, t, d)
    n, t, c, h, w = 2, 8, 4, 16, 16
    d = 32
    feat = c * h * w  # 1024

    key = jax.random.PRNGKey(0)
    kx, kw = jax.random.split(key)

    x = jax.random.normal(kx, (n, t, c, h, w), dtype=jnp.float32)

    # Deterministic parameter init (kaiming-uniform-like scale), no checkpoints.
    limit = 1.0 / jnp.sqrt(jnp.float32(feat))
    weight = jax.random.uniform(
        kw, (feat, d), dtype=jnp.float32, minval=-limit, maxval=limit
    )
    bias = jnp.zeros((d,), dtype=jnp.float32)

    out = base_backbone_forward(x, weight, bias)
    out = jax.block_until_ready(out)

    assert out.shape == (n, t, d), out.shape

    # Reference with the same bf16 input rounding (f32 accumulation).
    x_bf = x.reshape(n * t, feat).astype(jnp.bfloat16).astype(jnp.float32)
    w_bf = weight.astype(jnp.bfloat16).astype(jnp.float32)
    ref = (x_bf @ w_bf + bias.reshape(1, d)).reshape(n, t, d)
    max_err = float(jnp.max(jnp.abs(out - ref)))
    assert jnp.allclose(out, ref, atol=1e-2, rtol=1e-2), max_err

    print("KERNEL_OK")
</pallas_src>

<mosaic_0001>
module attributes {stable_mosaic.version = 11 : i64} {
  func.func @backbone_proj_kernel(%arg0: i32, %arg1: i32, %arg2: i32, %arg3: memref<16x1024xbf16, #tpu.memory_space<vmem>>, %arg4: memref<1024x128xbf16, #tpu.memory_space<vmem>>, %arg5: memref<1x128xf32, #tpu.memory_space<vmem>>, %arg6: memref<16x128xf32, #tpu.memory_space<vmem>>, %arg7: memref<16x128xf32, #tpu.memory_space<vmem>>) attributes {dimension_semantics = [#tpu.dimension_semantics<parallel>, #tpu.dimension_semantics<parallel>, #tpu.dimension_semantics<arbitrary>], iteration_bounds = array<i64: 1, 1, 1>, scalar_prefetch = 0 : i64, scratch_operands = 1 : i64, tpu.core_type = #tpu.core_type<tc>, window_params = [{transform_indices = @transform_0, window_bounds = array<i64: 16, 1024>}, {transform_indices = @transform_1, window_bounds = array<i64: 1024, 128>}, {transform_indices = @transform_2, window_bounds = array<i64: 1, 128>}, {transform_indices = @transform_3, window_bounds = array<i64: 16, 128>}]} {
    %c0_i32 = arith.constant 0 : i32
    %0 = arith.cmpi eq, %arg2, %c0_i32 : i32
    %1 = arith.extui %0 : i1 to i32
    %c0_i32_0 = arith.constant 0 : i32
    %2 = arith.cmpi ne, %1, %c0_i32_0 : i32
    scf.if %2 {
      %cst_10 = arith.constant 0.000000e+00 : f32
      %12 = vector.broadcast %cst_10 : f32 to vector<16x128xf32>
      %c0_11 = arith.constant 0 : index
      %c0_12 = arith.constant 0 : index
      %13 = vector.load %arg7[%c0_11, %c0_12] : memref<16x128xf32, #tpu.memory_space<vmem>>, vector<16x128xf32>
      tpu.vector_store %arg7[%c0_11, %c0_12], %12 {strides = array<i32>} : memref<16x128xf32, #tpu.memory_space<vmem>>, vector<16x128xf32>,
    } else {
    }
    %c0 = arith.constant 0 : index
    %c0_1 = arith.constant 0 : index
    %3 = vector.load %arg7[%c0, %c0_1] : memref<16x128xf32, #tpu.memory_space<vmem>>, vector<16x128xf32>
    %c0_2 = arith.constant 0 : index
    %c0_3 = arith.constant 0 : index
    %4 = vector.load %arg3[%c0_2, %c0_3] : memref<16x1024xbf16, #tpu.memory_space<vmem>>, vector<16x1024xbf16>
    %c0_4 = arith.constant 0 : index
    %c0_5 = arith.constant 0 : index
    %5 = vector.load %arg4[%c0_4, %c0_5] : memref<1024x128xbf16, #tpu.memory_space<vmem>>, vector<1024x128xbf16>
    %cst = arith.constant dense<0.000000e+00> : vector<16x128xf32>
    %6 = tpu.matmul %4, %5, %cst {dimension_numbers = #tpu.dot_dimension_numbers<[1], [0], [0], [1], [0, 0, 1, 1], [], []>} : vector<16x1024xbf16>, vector<1024x128xbf16>, vector<16x128xf32> -> vector<16x128xf32>
    %7 = arith.addf %3, %6 : vector<16x128xf32>
    %c0_6 = arith.constant 0 : index
    %c0_7 = arith.constant 0 : index
    %8 = vector.load %arg7[%c0_6, %c0_7] : memref<16x128xf32, #tpu.memory_space<vmem>>, vector<16x128xf32>
    tpu.vector_store %arg7[%c0_6, %c0_7], %7 {strides = array<i32>} : memref<16x128xf32, #tpu.memory_space<vmem>>, vector<16x128xf32>,
    %c0_i32_8 = arith.constant 0 : i32
    %9 = arith.cmpi eq, %arg2, %c0_i32_8 : i32
    %10 = arith.extui %9 : i1 to i32
    %c0_i32_9 = arith.constant 0 : i32
    %11 = arith.cmpi ne, %10, %c0_i32_9 : i32
    scf.if %11 {
      %c0_10 = arith.constant 0 : index
      %c0_11 = arith.constant 0 : index
      %12 = vector.load %arg7[%c0_10, %c0_11] : memref<16x128xf32, #tpu.memory_space<vmem>>, vector<16x128xf32>
      %c0_12 = arith.constant 0 : index
      %c0_13 = arith.constant 0 : index
      %13 = vector.load %arg5[%c0_12, %c0_13] : memref<1x128xf32, #tpu.memory_space<vmem>>, vector<1x128xf32>
      %14 = vector.broadcast %13 : vector<1x128xf32> to vector<16x128xf32>
      %15 = arith.addf %12, %14 : vector<16x128xf32>
      %c0_14 = arith.constant 0 : index
      %c0_15 = arith.constant 0 : index
      %16 = vector.load %arg6[%c0_14, %c0_15] : memref<16x128xf32, #tpu.memory_space<vmem>>, vector<16x128xf32>
      tpu.vector_store %arg6[%c0_14, %c0_15], %15 {strides = array<i32>} : memref<16x128xf32, #tpu.memory_space<vmem>>, vector<16x128xf32>,
    } else {
    }
    return
  }
  func.func @transform_0(%arg0: i32, %arg1: i32, %arg2: i32) -> (i32, i32) {
    %c0_i32 = arith.constant 0 : i32
    return %arg0, %arg2 : i32, i32
  }
  func.func @transform_1(%arg0: i32, %arg1: i32, %arg2: i32) -> (i32, i32) {
    %c0_i32 = arith.constant 0 : i32
    return %arg2, %arg1 : i32, i32
  }
  func.func @transform_2(%arg0: i32, %arg1: i32, %arg2: i32) -> (i32, i32) {
    %c0_i32 = arith.constant 0 : i32
    %c0_i32_0 = arith.constant 0 : i32
    return %c0_i32, %arg1 : i32, i32
  }
  func.func @transform_3(%arg0: i32, %arg1: i32, %arg2: i32) -> (i32, i32) {
    %c0_i32 = arith.constant 0 : i32
    return %arg0, %arg1 : i32, i32
  }
}

</mosaic_0001>

<llo_original>
// kernel: tpu_custom_call.1
$region0: #{tpu_custom_call.1}
  #allocation0 [shape = 'u32[]', space=smem, size = 0x4, offset = 0x4, fixed_abs, tag = 'smem constant byte address 0x4 - core index']
  #allocation1 [shape = 'u32[144,128]{1,0:T(1,128)}', space=vmem, size = 0x12000, scoped, tag = 'internal scratch']
  #allocation2 [shape = 'f32[16,128]{1,0:T(8,128)}', space=vmem, size = 0x2000, scoped, tag = 'scratch operand']
  %s0 = inlined_call_operand.hbm [shape: bf16[16,1024], index: 0, kind: input, shape index: {}]
  %s1 = inlined_call_operand.hbm [shape: bf16[1024,128], index: 1, kind: input, shape index: {}]
  %s2 = inlined_call_operand.vmem [shape: f32[1,128], index: 2, kind: input, shape index: {}]
  %s3 = inlined_call_operand.hbm [shape: f32[16,128], index: 3, kind: output, shape index: {}]
  %s4 = sld [smem:[#allocation0]]
  $region38: #{tpu_custom_call.1} parent=0
    _
  %s6 = ssub.s32 1, %s4
  %s7 = scalar_select 0, %s6, %s4
  $region1: #{tpu_custom_call.1} parent=0
    #allocation3 [shape = 'u8[32768]{0}', space=vmem, size = 0x8000, scoped, tag = 'input window, operand 0, single buffered']
    #allocation4 [shape = 's32[1]{0}', space=sflag, size = 0x4, scoped, tag = 'scoped memory for tpu_custom_call.1']
    #allocation5 [shape = 's32[1]{0}', space=sflag, size = 0x4, scoped, tag = 'scoped memory for tpu_custom_call.1']
    #allocation6 [shape = 'u8[262144]{0}', space=vmem, size = 0x40000, scoped, tag = 'input window, operand 1, single buffered']
    #allocation7 [shape = 's32[1]{0}', space=sflag, size = 0x4, scoped, tag = 'scoped memory for tpu_custom_call.1']
    #allocation8 [shape = 'u8[8192]{0}', space=vmem, size = 0x2000, scoped, tag = 'output window, operand 0, single buffered']
    %8 = vsyncpa [#allocation4], 0
    %9 = vsyncpa [#allocation7], 0
    %10 = vsyncpa [#allocation5], 0
    // Predicated region
    $region2: #{tpu_custom_call.1} parent=1 // pred_check
      _
    $region3: #{tpu_custom_call.1} parent=1 // pred_check_branch
      %12 = sbr.rel (0) target = $region5
    $region4: #{tpu_custom_call.1} parent=1 // pred_region
      %s14 = ssub.s32 1024, 1024
      %15 = vsyncadd [#allocation4], %s14
      %s16 = sshll.u32 [#allocation3], 4
      %s17 = int_to_ptr.vmem [resolvable:$true] %s16
      %22 = dma.hbm_to_vmem [thread:$0]  %s0, 1024, %s17, [#allocation4], 512, 512, 32
    $region5: #{tpu_custom_call.1} parent=1 // pred_fallthru
      _
    // Predicated region
    $region6: #{tpu_custom_call.1} parent=1 // pred_check
      _
    $region7: #{tpu_custom_call.1} parent=1 // pred_check_branch
      %24 = sbr.rel (0) target = $region9
    $region8: #{tpu_custom_call.1} parent=1 // pred_region
      %s26 = ssub.s32 8192, 8192
      %27 = vsyncadd [#allocation7], %s26
      %s28 = sshll.u32 [#allocation6], 4
      %s29 = int_to_ptr.vmem [resolvable:$true] %s28
      %34 = dma.hbm_to_vmem [thread:$0]  %s1, 8192, %s29, [#allocation7], 64, 64, 4
    $region9: #{tpu_custom_call.1} parent=1 // pred_fallthru
      _
    // Predicated region
    $region10: #{tpu_custom_call.1} parent=1 // pred_check
      _
    $region11: #{tpu_custom_call.1} parent=1 // pred_check_branch
      %36 = sbr.rel (0) target = $region13
    $region12: #{tpu_custom_call.1} parent=1 // pred_region
      _
    $region13: #{tpu_custom_call.1} parent=1 // pred_fallthru
      _
    // Predicated region
    $region14: #{tpu_custom_call.1} parent=1 // pred_check
      _
    $region15: #{tpu_custom_call.1} parent=1 // pred_check_branch
      %38 = sbr.rel (0) target = $region17
    $region16: #{tpu_custom_call.1} parent=1 // pred_region
      %39 = dma.done [#allocation4], 1024
    $region17: #{tpu_custom_call.1} parent=1 // pred_fallthru
      _
    // Predicated region
    $region18: #{tpu_custom_call.1} parent=1 // pred_check
      _
    $region19: #{tpu_custom_call.1} parent=1 // pred_check_branch
      %41 = sbr.rel (0) target = $region21
    $region20: #{tpu_custom_call.1} parent=1 // pred_region
      %42 = dma.done [#allocation7], 8192
    $region21: #{tpu_custom_call.1} parent=1 // pred_fallthru
      _
    %p44 = scmp.eq.s32.totalorder 0, 0
    // Predicated region
    $region22: #{tpu_custom_call.1} parent=1 // pred_check
      %p45 = pneg %p44
    $region23: #{tpu_custom_call.1} parent=1 // pred_check_branch
      %47 = sbr.rel (%p45) target = $region25
    $region24: #{tpu_custom_call.1} parent=1 // pred_region
      %48 = vst [vmem:[#allocation2] sm:$0xff] 0.0
      %49 = vst [vmem:[#allocation2 + $0x8] sm:$0xff] 0.0
    $region25: #{tpu_custom_call.1} parent=1 // pred_fallthru
      _
    %v50 = vld [vmem:[#allocation2] sm:$0xff]
    %v51 = vld [vmem:[#allocation2 + $0x8] sm:$0xff]
    %v52 = vld [vmem:[#allocation3] sm:$0xff]
    %v53 = vld [vmem:[#allocation3 + $0x8] sm:$0xff]
    %v54 = vld [vmem:[#allocation3 + $0x10] sm:$0xff]
    %v55 = vld [vmem:[#allocation3 + $0x18] sm:$0xff]
    %v56 = vld [vmem:[#allocation3 + $0x20] sm:$0xff]
    %v57 = vld [vmem:[#allocation3 + $0x28] sm:$0xff]
    %v58 = vld [vmem:[#allocation3 + $0x30] sm:$0xff]
    %v59 = vld [vmem:[#allocation3 + $0x38] sm:$0xff]
    %v60 = vld [vmem:[#allocation6] sm:$0xf]
    %v61 = vld [vmem:[#allocation6 + $0x4] sm:$0xf]
    %v62 = vld [vmem:[#allocation6 + $0x8] sm:$0xf]
    %v63 = vld [vmem:[#allocation6 + $0xc] sm:$0xf]
    %v64 = vld [vmem:[#allocation6 + $0x10] sm:$0xf]
    %v65 = vld [vmem:[#allocation6 + $0x14] sm:$0xf]
    %v66 = vld [vmem:[#allocation6 + $0x18] sm:$0xf]
    %v67 = vld [vmem:[#allocation6 + $0x1c] sm:$0xf]
    %v68 = vld [vmem:[#allocation6 + $0x20] sm:$0xf]
    %v69 = vld [vmem:[#allocation6 + $0x24] sm:$0xf]
    %v70 = vld [vmem:[#allocation6 + $0x28] sm:$0xf]
    %v71 = vld [vmem:[#allocation6 + $0x2c] sm:$0xf]
    %v72 = vld [vmem:[#allocation6 + $0x30] sm:$0xf]
    %v73 = vld [vmem:[#allocation6 + $0x34] sm:$0xf]
    %v74 = vld [vmem:[#allocation6 + $0x38] sm:$0xf]
    %v75 = vld [vmem:[#allocation6 + $0x3c] sm:$0xf]
    %v76 = vld [vmem:[#allocation6 + $0x40] sm:$0xf]
    %v77 = vld [vmem:[#allocation6 + $0x44] sm:$0xf]
    %v78 = vld [vmem:[#allocation6 + $0x48] sm:$0xf]
    %v79 = vld [vmem:[#allocation6 + $0x4c] sm:$0xf]
    %v80 = vld [vmem:[#allocation6 + $0x50] sm:$0xf]
    %v81 = vld [vmem:[#allocation6 + $0x54] sm:$0xf]
    %v82 = vld [vmem:[#allocation6 + $0x58] sm:$0xf]
    %v83 = vld [vmem:[#allocation6 + $0x5c] sm:$0xf]
    %v84 = vld [vmem:[#allocation6 + $0x60] sm:$0xf]
    %v85 = vld [vmem:[#allocation6 + $0x64] sm:$0xf]
    %v86 = vld [vmem:[#allocation6 + $0x68] sm:$0xf]
    %v87 = vld [vmem:[#allocation6 + $0x6c] sm:$0xf]
    %v88 = vld [vmem:[#allocation6 + $0x70] sm:$0xf]
    %v89 = vld [vmem:[#allocation6 + $0x74] sm:$0xf]
    %v90 = vld [vmem:[#allocation6 + $0x78] sm:$0xf]
    %v91 = vld [vmem:[#allocation6 + $0x7c] sm:$0xf]
    %v92 = vld [vmem:[#allocation6 + $0x80] sm:$0xf]
    %v93 = vld [vmem:[#allocation6 + $0x84] sm:$0xf]
    %v94 = vld [vmem:[#allocation6 + $0x88] sm:$0xf]
    %v95 = vld [vmem:[#allocation6 + $0x8c] sm:$0xf]
    %v96 = vld [vmem:[#allocation6 + $0x90] sm:$0xf]
    %v97 = vld [vmem:[#allocation6 + $0x94] sm:$0xf]
    %v98 = vld [vmem:[#allocation6 + $0x98] sm:$0xf]
    %v99 = vld [vmem:[#allocation6 + $0x9c] sm:$0xf]
    %v100 = vld [vmem:[#allocation6 + $0xa0] sm:$0xf]
    %v101 = vld [vmem:[#allocation6 + $0xa4] sm:$0xf]
    %v102 = vld [vmem:[#allocation6 + $0xa8] sm:$0xf]
    %v103 = vld [vmem:[#allocation6 + $0xac] sm:$0xf]
    %v104 = vld [vmem:[#allocation6 + $0xb0] sm:$0xf]
    %v105 = vld [vmem:[#allocation6 + $0xb4] sm:$0xf]
    %v106 = vld [vmem:[#allocation6 + $0xb8] sm:$0xf]
    %v107 = vld [vmem:[#allocation6 + $0xbc] sm:$0xf]
    %v108 = vld [vmem:[#allocation6 + $0xc0] sm:$0xf]
    %v109 = vld [vmem:[#allocation6 + $0xc4] sm:$0xf]
    %v110 = vld [vmem:[#allocation6 + $0xc8] sm:$0xf]
    %v111 = vld [vmem:[#allocation6 + $0xcc] sm:$0xf]
    %v112 = vld [vmem:[#allocation6 + $0xd0] sm:$0xf]
    %v113 = vld [vmem:[#allocation6 + $0xd4] sm:$0xf]
    %v114 = vld [vmem:[#allocation6 + $0xd8] sm:$0xf]
    %v115 = vld [vmem:[#allocation6 + $0xdc] sm:$0xf]
    %v116 = vld [vmem:[#allocation6 + $0xe0] sm:$0xf]
    %v117 = vld [vmem:[#allocation6 + $0xe4] sm:$0xf]
    %v118 = vld [vmem:[#allocation6 + $0xe8] sm:$0xf]
    %v119 = vld [vmem:[#allocation6 + $0xec] sm:$0xf]
    %v120 = vld [vmem:[#allocation6 + $0xf0] sm:$0xf]
    %v121 = vld [vmem:[#allocation6 + $0xf4] sm:$0xf]
    %v122 = vld [vmem:[#allocation6 + $0xf8] sm:$0xf]
    %v123 = vld [vmem:[#allocation6 + $0xfc] sm:$0xf]
    %v124 = vld [vmem:[#allocation6 + $0x100] sm:$0xf]
    %v125 = vld [vmem:[#allocation6 + $0x104] sm:$0xf]
    %v126 = vld [vmem:[#allocation6 + $0x108] sm:$0xf]
    %v127 = vld [vmem:[#allocation6 + $0x10c] sm:$0xf]
    %v128 = vld [vmem:[#allocation6 + $0x110] sm:$0xf]
    %v129 = vld [vmem:[#allocation6 + $0x114] sm:$0xf]
    %v130 = vld [vmem:[#allocation6 + $0x118] sm:$0xf]
    %v131 = vld [vmem:[#allocation6 + $0x11c] sm:$0xf]
    %v132 = vld [vmem:[#allocation6 + $0x120] sm:$0xf]
    %v133 = vld [vmem:[#allocation6 + $0x124] sm:$0xf]
    %v134 = vld [vmem:[#allocation6 + $0x128] sm:$0xf]
    %v135 = vld [vmem:[#allocation6 + $0x12c] sm:$0xf]
    %v136 = vld [vmem:[#allocation6 + $0x130] sm:$0xf]
    %v137 = vld [vmem:[#allocation6 + $0x134] sm:$0xf]
    %v138 = vld [vmem:[#allocation6 + $0x138] sm:$0xf]
    %v139 = vld [vmem:[#allocation6 + $0x13c] sm:$0xf]
    %v140 = vld [vmem:[#allocation6 + $0x140] sm:$0xf]
    %v141 = vld [vmem:[#allocation6 + $0x144] sm:$0xf]
    %v142 = vld [vmem:[#allocation6 + $0x148] sm:$0xf]
    %v143 = vld [vmem:[#allocation6 + $0x14c] sm:$0xf]
    %v144 = vld [vmem:[#allocation6 + $0x150] sm:$0xf]
    %v145 = vld [vmem:[#allocation6 + $0x154] sm:$0xf]
    %v146 = vld [vmem:[#allocation6 + $0x158] sm:$0xf]
    %v147 = vld [vmem:[#allocation6 + $0x15c] sm:$0xf]
    %v148 = vld [vmem:[#allocation6 + $0x160] sm:$0xf]
    %v149 = vld [vmem:[#allocation6 + $0x164] sm:$0xf]
    %v150 = vld [vmem:[#allocation6 + $0x168] sm:$0xf]
    %v151 = vld [vmem:[#allocation6 + $0x16c] sm:$0xf]
    %v152 = vld [vmem:[#allocation6 + $0x170] sm:$0xf]
    %v153 = vld [vmem:[#allocation6 + $0x174] sm:$0xf]
    %v154 = vld [vmem:[#allocation6 + $0x178] sm:$0xf]
    %v155 = vld [vmem:[#allocation6 + $0x17c] sm:$0xf]
    %v156 = vld [vmem:[#allocation6 + $0x180] sm:$0xf]
    %v157 = vld [vmem:[#allocation6 + $0x184] sm:$0xf]
    %v158 = vld [vmem:[#allocation6 + $0x188] sm:$0xf]
    %v159 = vld [vmem:[#allocation6 + $0x18c] sm:$0xf]
    %v160 = vld [vmem:[#allocation6 + $0x190] sm:$0xf]
    %v161 = vld [vmem:[#allocation6 + $0x194] sm:$0xf]
    %v162 = vld [vmem:[#allocation6 + $0x198] sm:$0xf]
    %v163 = vld [vmem:[#allocation6 + $0x19c] sm:$0xf]
    %v164 = vld [vmem:[#allocation6 + $0x1a0] sm:$0xf]
    %v165 = vld [vmem:[#allocation6 + $0x1a4] sm:$0xf]
    %v166 = vld [vmem:[#allocation6 + $0x1a8] sm:$0xf]
    %v167 = vld [vmem:[#allocation6 + $0x1ac] sm:$0xf]
    %v168 = vld [vmem:[#allocation6 + $0x1b0] sm:$0xf]
    %v169 = vld [vmem:[#allocation6 + $0x1b4] sm:$0xf]
    %v170 = vld [vmem:[#allocation6 + $0x1b8] sm:$0xf]
    %v171 = vld [vmem:[#allocation6 + $0x1bc] sm:$0xf]
    %v172 = vld [vmem:[#allocation6 + $0x1c0] sm:$0xf]
    %v173 = vld [vmem:[#allocation6 + $0x1c4] sm:$0xf]
    %v174 = vld [vmem:[#allocation6 + $0x1c8] sm:$0xf]
    %v175 = vld [vmem:[#allocation6 + $0x1cc] sm:$0xf]
    %v176 = vld [vmem:[#allocation6 + $0x1d0] sm:$0xf]
    %v177 = vld [vmem:[#allocation6 + $0x1d4] sm:$0xf]
    %v178 = vld [vmem:[#allocation6 + $0x1d8] sm:$0xf]
    %v179 = vld [vmem:[#allocation6 + $0x1dc] sm:$0xf]
    %v180 = vld [vmem:[#allocation6 + $0x1e0] sm:$0xf]
    %v181 = vld [vmem:[#allocation6 + $0x1e4] sm:$0xf]
    %v182 = vld [vmem:[#allocation6 + $0x1e8] sm:$0xf]
    %v183 = vld [vmem:[#allocation6 + $0x1ec] sm:$0xf]
    %v184 = vld [vmem:[#allocation6 + $0x1f0] sm:$0xf]
    %v185 = vld [vmem:[#allocation6 + $0x1f4] sm:$0xf]
    %v186 = vld [vmem:[#allocation6 + $0x1f8] sm:$0xf]
    %v187 = vld [vmem:[#allocation6 + $0x1fc] sm:$0xf]
    %v196 = vunpack.c.l.b16 %v52
    %v197 = vunpack.c.h.b16 %v52
    %v198 = vunpack.c.l.b16 %v53
    %v199 = vunpack.c.h.b16 %v53
    %v200 = vunpack.c.l.b16 %v54
    %v201 = vunpack.c.h.b16 %v54
    %v202 = vunpack.c.l.b16 %v55
    %v203 = vunpack.c.h.b16 %v55
    %v204 = vunpack.c.l.b16 %v56
    %v205 = vunpack.c.h.b16 %v56
    %v206 = vunpack.c.l.b16 %v57
    %v207 = vunpack.c.h.b16 %v57
    %v208 = vunpack.c.l.b16 %v58
    %v209 = vunpack.c.h.b16 %v58
    %v210 = vunpack.c.l.b16 %v59
    %v211 = vunpack.c.h.b16 %v59
    %v212 = vpack.c.b16 %v204, %v196
    %v213 = vpack.c.b16 %v205, %v197
    %v214 = vpack.c.b16 %v206, %v198
    %v215 = vpack.c.b16 %v207, %v199
    %v216 = vpack.c.b16 %v208, %v200
    %v217 = vpack.c.b16 %v209, %v201
    %v218 = vpack.c.b16 %v210, %v202
    %v219 = vpack.c.b16 %v211, %v203
    %v356 = vunpack.c.l.b16 %v60
    %v357 = vunpack.c.l.b16 %v61
    %v358 = vunpack.c.l.b16 %v62
    %v359 = vunpack.c.l.b16 %v63
    %v360 = vunpack.c.l.b16 %v64
    %v361 = vunpack.c.l.b16 %v65
    %v362 = vunpack.c.l.b16 %v66
    %v363 = vunpack.c.l.b16 %v67
    %v364 = vunpack.c.l.b16 %v68
    %v365 = vunpack.c.l.b16 %v69
    %v366 = vunpack.c.l.b16 %v70
    %v367 = vunpack.c.l.b16 %v71
    %v368 = vunpack.c.l.b16 %v72
    %v369 = vunpack.c.l.b16 %v73
    %v370 = vunpack.c.l.b16 %v74
    %v371 = vunpack.c.l.b16 %v75
    %v372 = vunpack.c.l.b16 %v76
    %v373 = vunpack.c.l.b16 %v77
    %v374 = vunpack.c.l.b16 %v78
    %v375 = vunpack.c.l.b16 %v79
    %v376 = vunpack.c.l.b16 %v80
    %v377 = vunpack.c.l.b16 %v81
    %v378 = vunpack.c.l.b16 %v82
    %v379 = vunpack.c.l.b16 %v83
    %v380 = vunpack.c.l.b16 %v84
    %v381 = vunpack.c.l.b16 %v85
    %v382 = vunpack.c.l.b16 %v86
    %v383 = vunpack.c.l.b16 %v87
    %v384 = vunpack.c.l.b16 %v88
    %v385 = vunpack.c.l.b16 %v89
    %v386 = vunpack.c.l.b16 %v90
    %v387 = vunpack.c.l.b16 %v91
    %v388 = vunpack.c.l.b16 %v92
    %v389 = vunpack.c.l.b16 %v93
    %v390 = vunpack.c.l.b16 %v94
    %v391 = vunpack.c.l.b16 %v95
    %v392 = vunpack.c.l.b16 %v96
    %v393 = vunpack.c.l.b16 %v97
    %v394 = vunpack.c.l.b16 %v98
    %v395 = vunpack.c.l.b16 %v99
    %v396 = vunpack.c.l.b16 %v100
    %v397 = vunpack.c.l.b16 %v101
    %v398 = vunpack.c.l.b16 %v102
    %v399 = vunpack.c.l.b16 %v103
    %v400 = vunpack.c.l.b16 %v104
    %v401 = vunpack.c.l.b16 %v105
    %v402 = vunpack.c.l.b16 %v106
    %v403 = vunpack.c.l.b16 %v107
    %v404 = vunpack.c.l.b16 %v108
    %v405 = vunpack.c.l.b16 %v109
    %v406 = vunpack.c.l.b16 %v110
    %v407 = vunpack.c.l.b16 %v111
    %v408 = vunpack.c.l.b16 %v112
    %v409 = vunpack.c.l.b16 %v113
    %v410 = vunpack.c.l.b16 %v114
    %v411 = vunpack.c.l.b16 %v115
    %v412 = vunpack.c.l.b16 %v116
    %v413 = vunpack.c.l.b16 %v117
    %v414 = vunpack.c.l.b16 %v118
    %v415 = vunpack.c.l.b16 %v119
    %v416 = vunpack.c.l.b16 %v120
    %v417 = vunpack.c.l.b16 %v121
    %v418 = vunpack.c.l.b16 %v122
    %v419 = vunpack.c.l.b16 %v123
    %v420 = vunpack.c.l.b16 %v124
    %v421 = vunpack.c.l.b16 %v125
    %v422 = vunpack.c.l.b16 %v126
    %v423 = vunpack.c.l.b16 %v127
    %v424 = vunpack.c.l.b16 %v128
    %v425 = vunpack.c.l.b16 %v129
    %v426 = vunpack.c.l.b16 %v130
    %v427 = vunpack.c.l.b16 %v131
    %v428 = vunpack.c.l.b16 %v132
    %v429 = vunpack.c.l.b16 %v133
    %v430 = vunpack.c.l.b16 %v134
    %v431 = vunpack.c.l.b16 %v135
    %v432 = vunpack.c.l.b16 %v136
    %v433 = vunpack.c.l.b16 %v137
    %v434 = vunpack.c.l.b16 %v138
    %v435 = vunpack.c.l.b16 %v139
    %v436 = vunpack.c.l.b16 %v140
    %v437 = vunpack.c.l.b16 %v141
    %v438 = vunpack.c.l.b16 %v142
    %v439 = vunpack.c.l.b16 %v143
    %v440 = vunpack.c.l.b16 %v144
    %v441 = vunpack.c.l.b16 %v145
    %v442 = vunpack.c.l.b16 %v146
    %v443 = vunpack.c.l.b16 %v147
    %v444 = vunpack.c.l.b16 %v148
    %v445 = vunpack.c.l.b16 %v149
    %v446 = vunpack.c.l.b16 %v150
    %v447 = vunpack.c.l.b16 %v151
    %v448 = vunpack.c.l.b16 %v152
    %v449 = vunpack.c.l.b16 %v153
    %v450 = vunpack.c.l.b16 %v154
    %v451 = vunpack.c.l.b16 %v155
    %v452 = vunpack.c.l.b16 %v156
    %v453 = vunpack.c.l.b16 %v157
    %v454 = vunpack.c.l.b16 %v158
    %v455 = vunpack.c.l.b16 %v159
    %v456 = vunpack.c.l.b16 %v160
    %v457 = vunpack.c.l.b16 %v161
    %v458 = vunpack.c.l.b16 %v162
    %v459 = vunpack.c.l.b16 %v163
    %v460 = vunpack.c.l.b16 %v164
    %v461 = vunpack.c.l.b16 %v165
    %v462 = vunpack.c.l.b16 %v166
    %v463 = vunpack.c.l.b16 %v167
    %v464 = vunpack.c.l.b16 %v168
    %v465 = vunpack.c.l.b16 %v169
    %v466 = vunpack.c.l.b16 %v170
    %v467 = vunpack.c.l.b16 %v171
    %v468 = vunpack.c.l.b16 %v172
    %v469 = vunpack.c.l.b16 %v173
    %v470 = vunpack.c.l.b16 %v174
    %v471 = vunpack.c.l.b16 %v175
    %v472 = vunpack.c.l.b16 %v176
    %v473 = vunpack.c.l.b16 %v177
    %v474 = vunpack.c.l.b16 %v178
    %v475 = vunpack.c.l.b16 %v179
    %v476 = vunpack.c.l.b16 %v180
    %v477 = vunpack.c.l.b16 %v181
    %v478 = vunpack.c.l.b16 %v182
    %v479 = vunpack.c.l.b16 %v183
    %v480 = vunpack.c.l.b16 %v184
    %v481 = vunpack.c.l.b16 %v185
    %v482 = vunpack.c.l.b16 %v186
    %v483 = vunpack.c.l.b16 %v187
    %v484 = vpack.c.b16 %v357, %v356
    %v485 = vpack.c.b16 %v359, %v358
    %v486 = vpack.c.b16 %v361, %v360
    %v487 = vpack.c.b16 %v363, %v362
    %v488 = vpack.c.b16 %v365, %v364
    %v489 = vpack.c.b16 %v367, %v366
    %v490 = vpack.c.b16 %v369, %v368
    %v491 = vpack.c.b16 %v371, %v370
    %v492 = vpack.c.b16 %v373, %v372
    %v493 = vpack.c.b16 %v375, %v374
    %v494 = vpack.c.b16 %v377, %v376
    %v495 = vpack.c.b16 %v379, %v378
    %v496 = vpack.c.b16 %v381, %v380
    %v497 = vpack.c.b16 %v383, %v382
    %v498 = vpack.c.b16 %v385, %v384
    %v499 = vpack.c.b16 %v387, %v386
    %v500 = vpack.c.b16 %v389, %v388
    %v501 = vpack.c.b16 %v391, %v390
    %v502 = vpack.c.b16 %v393, %v392
    %v503 = vpack.c.b16 %v395, %v394
    %v504 = vpack.c.b16 %v397, %v396
    %v505 = vpack.c.b16 %v399, %v398
    %v506 = vpack.c.b16 %v401, %v400
    %v507 = vpack.c.b16 %v403, %v402
    %v508 = vpack.c.b16 %v405, %v404
    %v509 = vpack.c.b16 %v407, %v406
    %v510 = vpack.c.b16 %v409, %v408
    %v511 = vpack.c.b16 %v411, %v410
    %v512 = vpack.c.b16 %v413, %v412
    %v513 = vpack.c.b16 %v415, %v414
    %v514 = vpack.c.b16 %v417, %v416
    %v515 = vpack.c.b16 %v419, %v418
    %v516 = vpack.c.b16 %v421, %v420
    %v517 = vpack.c.b16 %v423, %v422
    %v518 = vpack.c.b16 %v425, %v424
    %v519 = vpack.c.b16 %v427, %v426
    %v520 = vpack.c.b16 %v429, %v428
    %v521 = vpack.c.b16 %v431, %v430
    %v522 = vpack.c.b16 %v433, %v432
    %v523 = vpack.c.b16 %v435, %v434
    %v524 = vpack.c.b16 %v437, %v436
    %v525 = vpack.c.b16 %v439, %v438
    %v526 = vpack.c.b16 %v441, %v440
    %v527 = vpack.c.b16 %v443, %v442
    %v528 = vpack.c.b16 %v445, %v444
    %v529 = vpack.c.b16 %v447, %v446
    %v530 = vpack.c.b16 %v449, %v448
    %v531 = vpack.c.b16 %v451, %v450
    %v532 = vpack.c.b16 %v453, %v452
    %v533 = vpack.c.b16 %v455, %v454
    %v534 = vpack.c.b16 %v457, %v456
    %v535 = vpack.c.b16 %v459, %v458
    %v536 = vpack.c.b16 %v461, %v460
    %v537 = vpack.c.b16 %v463, %v462
    %v538 = vpack.c.b16 %v465, %v464
    %v539 = vpack.c.b16 %v467, %v466
    %v540 = vpack.c.b16 %v469, %v468
    %v541 = vpack.c.b16 %v471, %v470
    %v542 = vpack.c.b16 %v473, %v472
    %v543 = vpack.c.b16 %v475, %v474
    %v544 = vpack.c.b16 %v477, %v476
    %v545 = vpack.c.b16 %v479, %v478
    %v546 = vpack.c.b16 %v481, %v480
    %v547 = vpack.c.b16 %v483, %v482
    %612 = vmatprep.subr.bf16.mxu0 0
    %613 = vmatpush1.bf16.msra.mxu0 %v484
    %614 = vmatprep.subr.bf16.mxu0 0
    %615 = vmatpush1.bf16.msra.mxu0 %v485
    %616 = vmatprep.subr.bf16.mxu0 0
    %617 = vmatpush1.bf16.msra.mxu0 %v486
    %618 = vmatprep.subr.bf16.mxu0 0
    %619 = vmatpush1.bf16.msra.mxu0 %v487
    %620 = vmatprep.subr.bf16.mxu0 0
    %621 = vmatpush1.bf16.msra.mxu0 %v488
    %622 = vmatprep.subr.bf16.mxu0 0
    %623 = vmatpush1.bf16.msra.mxu0 %v489
    %624 = vmatprep.subr.bf16.mxu0 0
    %625 = vmatpush1.bf16.msra.mxu0 %v490
    %626 = vmatprep.subr.bf16.mxu0 0
    %627 = vmatpush1.bf16.msra.mxu0 %v491
    %628 = vmatprep.subr.bf16.mxu0 0
    %629 = vmatpush1.bf16.msra.mxu0 %v492
    %630 = vmatprep.subr.bf16.mxu0 0
    %631 = vmatpush1.bf16.msra.mxu0 %v493
    %632 = vmatprep.subr.bf16.mxu0 0
    %633 = vmatpush1.bf16.msra.mxu0 %v494
    %634 = vmatprep.subr.bf16.mxu0 0
    %635 = vmatpush1.bf16.msra.mxu0 %v495
    %636 = vmatprep.subr.bf16.mxu0 0
    %637 = vmatpush1.bf16.msra.mxu0 %v496
    %638 = vmatprep.subr.bf16.mxu0 0
    %639 = vmatpush1.bf16.msra.mxu0 %v497
    %640 = vmatprep.subr.bf16.mxu0 0
    %641 = vmatpush1.bf16.msra.mxu0 %v498
    %642 = vmatprep.subr.bf16.mxu0 0
    %643 = vmatpush1.bf16.msra.mxu0 %v499
    %644 = vmatprep.mubr.bf16.mxu0 %v213
    %645 = vmatmul.mubr.bf16.gmra.mrb[0].mxu0 %v212
    %v646 = vpop.f32.mrb[0].mxu0
    %v647 = vadd.f32 0.0, %v646
    %v648 = vpop.f32.mrb[0].mxu0
    %v649 = vpop.f32.mrb[0].mxu0
    %v650 = vadd.f32 0.0, %v649
    %v651 = vpop.f32.mrb[0].mxu0
    %652 = vdwg.mxu0
    %653 = vmatprep.subr.bf16.mxu0 0
    %654 = vmatpush1.bf16.msra.mxu0 %v500
    %655 = vmatprep.subr.bf16.mxu0 0
    %656 = vmatpush1.bf16.msra.mxu0 %v501
    %657 = vmatprep.subr.bf16.mxu0 0
    %658 = vmatpush1.bf16.msra.mxu0 %v502
    %659 = vmatprep.subr.bf16.mxu0 0
    %660 = vmatpush1.bf16.msra.mxu0 %v503
    %661 = vmatprep.subr.bf16.mxu0 0
    %662 = vmatpush1.bf16.msra.mxu0 %v504
    %663 = vmatprep.subr.bf16.mxu0 0
    %664 = vmatpush1.bf16.msra.mxu0 %v505
    %665 = vmatprep.subr.bf16.mxu0 0
    %666 = vmatpush1.bf16.msra.mxu0 %v506
    %667 = vmatprep.subr.bf16.mxu0 0
    %668 = vmatpush1.bf16.msra.mxu0 %v507
    %669 = vmatprep.subr.bf16.mxu0 0
    %670 = vmatpush1.bf16.msra.mxu0 %v508
    %671 = vmatprep.subr.bf16.mxu0 0
    %672 = vmatpush1.bf16.msra.mxu0 %v509
    %673 = vmatprep.subr.bf16.mxu0 0
    %674 = vmatpush1.bf16.msra.mxu0 %v510
    %675 = vmatprep.subr.bf16.mxu0 0
    %676 = vmatpush1.bf16.msra.mxu0 %v511
    %677 = vmatprep.subr.bf16.mxu0 0
    %678 = vmatpush1.bf16.msra.mxu0 %v512
    %679 = vmatprep.subr.bf16.mxu0 0
    %680 = vmatpush1.bf16.msra.mxu0 %v513
    %681 = vmatprep.subr.bf16.mxu0 0
    %682 = vmatpush1.bf16.msra.mxu0 %v514
    %683 = vmatprep.subr.bf16.mxu0 0
    %684 = vmatpush1.bf16.msra.mxu0 %v515
    %685 = vmatprep.mubr.bf16.mxu0 %v215
    %686 = vmatmul.mubr.bf16.gmra.mrb[0].mxu0 %v214
    %v687 = vpop.f32.mrb[0].mxu0
    %v688 = vadd.f32 %v647, %v687
    %v689 = vpop.f32.mrb[0].mxu0
    %v690 = vpop.f32.mrb[0].mxu0
    %v691 = vadd.f32 %v650, %v690
    %v692 = vpop.f32.mrb[0].mxu0
    %693 = vdwg.mxu0
    %694 = vmatprep.subr.bf16.mxu0 0
    %695 = vmatpush1.bf16.msra.mxu0 %v516
    %696 = vmatprep.subr.bf16.mxu0 0
    %697 = vmatpush1.bf16.msra.mxu0 %v517
    %698 = vmatprep.subr.bf16.mxu0 0
    %699 = vmatpush1.bf16.msra.mxu0 %v518
    %700 = vmatprep.subr.bf16.mxu0 0
    %701 = vmatpush1.bf16.msra.mxu0 %v519
    %702 = vmatprep.subr.bf16.mxu0 0
    %703 = vmatpush1.bf16.msra.mxu0 %v520
    %704 = vmatprep.subr.bf16.mxu0 0
    %705 = vmatpush1.bf16.msra.mxu0 %v521
    %706 = vmatprep.subr.bf16.mxu0 0
    %707 = vmatpush1.bf16.msra.mxu0 %v522
    %708 = vmatprep.subr.bf16.mxu0 0
    %709 = vmatpush1.bf16.msra.mxu0 %v523
    %710 = vmatprep.subr.bf16.mxu0 0
    %711 = vmatpush1.bf16.msra.mxu0 %v524
    %712 = vmatprep.subr.bf16.mxu0 0
    %713 = vmatpush1.bf16.msra.mxu0 %v525
    %714 = vmatprep.subr.bf16.mxu0 0
    %715 = vmatpush1.bf16.msra.mxu0 %v526
    %716 = vmatprep.subr.bf16.mxu0 0
    %717 = vmatpush1.bf16.msra.mxu0 %v527
    %718 = vmatprep.subr.bf16.mxu0 0
    %719 = vmatpush1.bf16.msra.mxu0 %v528
    %720 = vmatprep.subr.bf16.mxu0 0
    %721 = vmatpush1.bf16.msra.mxu0 %v529
    %722 = vmatprep.subr.bf16.mxu0 0
    %723 = vmatpush1.bf16.msra.mxu0 %v530
    %724 = vmatprep.subr.bf16.mxu0 0
    %725 = vmatpush1.bf16.msra.mxu0 %v531
    %726 = vmatprep.mubr.bf16.mxu0 %v217
    %727 = vmatmul.mubr.bf16.gmra.mrb[0].mxu0 %v216
    %v728 = vpop.f32.mrb[0].mxu0
    %v729 = vadd.f32 %v688, %v728
    %v730 = vpop.f32.mrb[0].mxu0
    %v731 = vpop.f32.mrb[0].mxu0
    %v732 = vadd.f32 %v691, %v731
    %v733 = vpop.f32.mrb[0].mxu0
    %734 = vdwg.mxu0
    %735 = vmatprep.subr.bf16.mxu0 0
    %736 = vmatpush1.bf16.msra.mxu0 %v532
    %737 = vmatprep.subr.bf16.mxu0 0
    %738 = vmatpush1.bf16.msra.mxu0 %v533
    %739 = vmatprep.subr.bf16.mxu0 0
    %740 = vmatpush1.bf16.msra.mxu0 %v534
    %741 = vmatprep.subr.bf16.mxu0 0
    %742 = vmatpush1.bf16.msra.mxu0 %v535
    %743 = vmatprep.subr.bf16.mxu0 0
    %744 = vmatpush1.bf16.msra.mxu0 %v536
    %745 = vmatprep.subr.bf16.mxu0 0
    %746 = vmatpush1.bf16.msra.mxu0 %v537
    %747 = vmatprep.subr.bf16.mxu0 0
    %748 = vmatpush1.bf16.msra.mxu0 %v538
    %749 = vmatprep.subr.bf16.mxu0 0
    %750 = vmatpush1.bf16.msra.mxu0 %v539
    %751 = vmatprep.subr.bf16.mxu0 0
    %752 = vmatpush1.bf16.msra.mxu0 %v540
    %753 = vmatprep.subr.bf16.mxu0 0
    %754 = vmatpush1.bf16.msra.mxu0 %v541
    %755 = vmatprep.subr.bf16.mxu0 0
    %756 = vmatpush1.bf16.msra.mxu0 %v542
    %757 = vmatprep.subr.bf16.mxu0 0
    %758 = vmatpush1.bf16.msra.mxu0 %v543
    %759 = vmatprep.subr.bf16.mxu0 0
    %760 = vmatpush1.bf16.msra.mxu0 %v544
    %761 = vmatprep.subr.bf16.mxu0 0
    %762 = vmatpush1.bf16.msra.mxu0 %v545
    %763 = vmatprep.subr.bf16.mxu0 0
    %764 = vmatpush1.bf16.msra.mxu0 %v546
    %765 = vmatprep.subr.bf16.mxu0 0
    %766 = vmatpush1.bf16.msra.mxu0 %v547
    %767 = vmatprep.mubr.bf16.mxu0 %v219
    %768 = vmatmul.mubr.bf16.gmra.mrb[0].mxu0 %v218
    %v769 = vpop.f32.mrb[0].mxu0
    %v770 = vadd.f32 %v729, %v769
    %v771 = vpop.f32.mrb[0].mxu0
    %v772 = vpop.f32.mrb[0].mxu0
    %v773 = vadd.f32 %v732, %v772
    %v774 = vpop.f32.mrb[0].mxu0
    %775 = vdwg.mxu0
    %v776 = vadd.f32 %v50, %v770
    %v777 = vadd.f32 %v51, %v773
    %778 = vst [vmem:[#allocation2] sm:$0xff] %v776
    %779 = vst [vmem:[#allocation2 + $0x8] sm:$0xff] %v777
    // Predicated region
    $region26: #{tpu_custom_call.1} parent=1 // pred_check
      %p780 = pneg %p44
    $region27: #{tpu_custom_call.1} parent=1 // pred_check_branch
      %782 = sbr.rel (%p780) target = $region29
    $region28: #{tpu_custom_call.1} parent=1 // pred_region
      %v783 = vld [vmem:[#allocation2] sm:$0xff]
      %v784 = vld [vmem:[#allocation2 + $0x8] sm:$0xff]
      %v785 = vld [vmem:[%s2] sm:$0x1]
      %v787 = vlaneseq
      %v788 = vshrl.u32 %v787, 7
      %v789 = vsub.s32 0, %v788
      %v790 = vrot.slane %v785, %v789
      %v792 = vadd.f32 %v783, %v790
      %v793 = vadd.f32 %v784, %v790
      %794 = vst [vmem:[#allocation8] sm:$0xff] %v792
      %795 = vst [vmem:[#allocation8 + $0x8] sm:$0xff] %v793
    $region29: #{tpu_custom_call.1} parent=1 // pred_fallthru
      _
    // Predicated region
    $region30: #{tpu_custom_call.1} parent=1 // pred_check
      _
    $region31: #{tpu_custom_call.1} parent=1 // pred_check_branch
      %797 = sbr.rel (0) target = $region33
    $region32: #{tpu_custom_call.1} parent=1 // pred_region
      %s799 = ssub.s32 256, 256
      %800 = vsyncadd [#allocation5], %s799
      %s801 = sshll.u32 [#allocation8], 4
      %s802 = int_to_ptr.vmem [resolvable:$true] %s801
      %807 = dma.vmem_to_hbm [thread:$0]  %s802, 256, %s3, [#allocation5], 128, 128, 8
    $region33: #{tpu_custom_call.1} parent=1 // pred_fallthru
      _
    // Predicated region
    $region34: #{tpu_custom_call.1} parent=1 // pred_check
      _
    $region35: #{tpu_custom_call.1} parent=1 // pred_check_branch
      %809 = sbr.rel (0) target = $region37
    $region36: #{tpu_custom_call.1} parent=1 // pred_region
      %810 = dma.done [#allocation5], 256
    $region37: #{tpu_custom_call.1} parent=1 // pred_fallthru
      _
    %811 = vsyncpa [#allocation4], 1
    %812 = vsyncpa [#allocation7], 1
    %813 = vsyncpa [#allocation5], 1

</llo_original>
